<compile_context>
chip_gen: v7x
topology: tpu7x:2x2x1
jax: 0.10.0
libtpu: 0.0.40
codegen_flags: <defaults>
</compile_context>

<pallas_src>
import functools

import jax
import jax.numpy as jnp
from jax.experimental import pallas as pl
from jax.experimental.pallas import tpu as pltpu


# ----------------------------------------------------------------------------
# Chebyshev graph-conv block (Chebynet) — the hot path.
# ----------------------------------------------------------------------------
def _cheby_kernel(s_ref, w_ref, x_ref, o_ref, *, K, N):
    """One batch tile of TB samples.

    s_ref: ((K-1)*N, N)            stacked non-identity supports [L; L@L; ...]     (bf16)
    w_ref: (K*TB*F_in, TB*F_out)   per-sample block-diagonal replicated weights    (bf16)
    x_ref: (1, N, TB*F_in)         nodes in rows, (sample, feature) in lanes       (bf16)
    o_ref: (1, N, TB*F_out)        relu(sum_k S_k x W_k), (sample, out-feat) lanes (bf16)
    """
    x_all = x_ref[0]                                                 # (N, TB*F_in)

    # Matmul 1: every non-identity Laplacian power applied to every sample at once.
    sx = jnp.dot(s_ref[...], x_all,
                 preferred_element_type=jnp.float32)                 # ((K-1)*N, TB*F_in) f32
    sx = sx.astype(x_all.dtype)                                      # bf16 for the 2nd MXU pass

    # K full-lane-width pieces (row slices of sx -> no narrow per-sample lane slicing),
    # concatenated ONCE along lanes at TB*F_in-aligned boundaries -> (N, K*TB*F_in).
    parts = [x_all] + [sx[k * N:(k + 1) * N, :] for k in range(K - 1)]
    sx_all = jnp.concatenate(parts, axis=1)

    # Matmul 2: block-diagonal weight -> output is already the lane-dense (N, TB*F_out)
    # slab; f32 accumulate, f32 ReLU epilogue (v5e-safe), one unmasked store.
    r = jnp.dot(sx_all, w_ref[...], preferred_element_type=jnp.float32)
    o_ref[0] = jnp.maximum(r, 0.0).astype(o_ref.dtype)


def chebynet_forward(x, L, weights, *, compute_dtype=jnp.bfloat16):
    """relu(sum_k (S_k @ x) @ W_k), S_0=I, S_k=S_{k-1}@L (plain powers, as in PyTorch).

    x: (B, N, F_in) f32,  L: (N, N) f32,  weights: (K, F_in, F_out) f32
    -> (B, N, F_out) bf16 activation slab (consumed by the bf16 FC head).
    """
    B, N, F_in = x.shape
    K, F_in_w, F_out = weights.shape
    assert F_in_w == F_in and L.shape == (N, N)
    assert K >= 2, "DGCNN uses K >= 2 Chebyshev orders"

    # Batch tile.  TB=32 keeps TB*F_in / TB*F_out at multiples of 128 for typical EEG
    # feature counts while the replicated block-diagonal weight (K*TB*F_in x TB*F_out bf16,
    # ~1.5 MiB at EEG sizes) stays tiny even for v7x's 64 MiB VMEM.  Small batches run as
    # a single full-batch tile (no forced extra grid steps).
    # TODO(synk): on v7x prefer an even num_tiles so both TensorCores get equal work, and
    # single-buffer the grid-invariant s/w operands (pipeline_mode=pl.Buffered(1)) if VMEM
    # ever becomes tight at much larger TB.
    TB = B if B <= 32 else 32
    num_tiles = pl.cdiv(B, TB)
    B_pad = num_tiles * TB

    # Supports: plain powers [L, L^2, ..., L^(K-1)] built in f32, cast only at the kernel
    # boundary.  The identity support is dropped (k=0 handled via x_all inside the kernel).
    L32 = L.astype(jnp.float32)
    powers = [L32]
    for _ in range(K - 2):
        powers.append(powers[-1] @ L32)
    s_cat = jnp.concatenate(powers, axis=0).astype(compute_dtype)        # ((K-1)*N, N)

    # Per-sample block-diagonal replicated weights:
    #   W_stack[k*TB*F_in + b*F_in + f, b*F_out + g] = W_k[f, g]
    eye_tb = jnp.eye(TB, dtype=jnp.float32)
    w_stack = jnp.concatenate(
        [jnp.kron(eye_tb, weights[k].astype(jnp.float32)) for k in range(K)],
        axis=0).astype(compute_dtype)                                    # (K*TB*F_in, TB*F_out)

    # x layout: (num_tiles, N, TB*F_in) — nodes in rows, (sample, feature) in lanes.
    # TODO(synk): if the real EEG feature count is lane-unfriendly (e.g. F_in=5), zero-pad
    # F_in to a multiple of 8 here (and pad the weight rows to match).
    x_pad = x.astype(jnp.float32)
    if B_pad != B:
        x_pad = jnp.pad(x_pad, ((0, B_pad - B), (0, 0), (0, 0)))
    x_tiles = (x_pad.reshape(num_tiles, TB, N, F_in)
               .transpose(0, 2, 1, 3)
               .reshape(num_tiles, N, TB * F_in)
               .astype(compute_dtype))

    flops = 2 * num_tiles * ((K - 1) * N * N * (TB * F_in)
                             + N * (K * TB * F_in) * (TB * F_out))
    bytes_accessed = (s_cat.size * s_cat.dtype.itemsize
                      + w_stack.size * w_stack.dtype.itemsize
                      + x_tiles.size * x_tiles.dtype.itemsize
                      + num_tiles * N * TB * F_out * 2)

    kernel = functools.partial(_cheby_kernel, K=K, N=N)

    out_tiles = pl.pallas_call(
        kernel,
        out_shape=jax.ShapeDtypeStruct((num_tiles, N, TB * F_out), compute_dtype),
        grid_spec=pltpu.PrefetchScalarGridSpec(
            num_scalar_prefetch=0,
            grid=(num_tiles,),
            in_specs=[
                # Grid-invariant operands (constant index_map -> not re-streamed per step).
                pl.BlockSpec(((K - 1) * N, N), lambda t: (0, 0)),
                pl.BlockSpec((K * TB * F_in, TB * F_out), lambda t: (0, 0)),
                pl.BlockSpec((1, N, TB * F_in), lambda t: (t, 0, 0)),
            ],
            out_specs=pl.BlockSpec((1, N, TB * F_out), lambda t: (t, 0, 0)),
        ),
        compiler_params=pltpu.CompilerParams(
            dimension_semantics=("parallel",),
            vmem_limit_bytes=32 * 1024 * 1024,
        ),
        cost_estimate=pl.CostEstimate(flops=flops, transcendentals=0,
                                      bytes_accessed=bytes_accessed),
    )(s_cat, w_stack, x_tiles)

    # (num_tiles, N, TB*F_out) -> (B, N, F_out): the only remaining wrapper-side layout
    # fix-up, a single XLA transpose over a bf16 activation slab (few hundred KB at EEG
    # scale).
    # TODO(synk): removable by fusing the FC head into the kernel (transpose the small
    # (N, TB, F_out) tile in-VMEM); kept out for lowering robustness.
    out = (out_tiles.reshape(num_tiles, N, TB, F_out)
           .transpose(0, 2, 1, 3)
           .reshape(B_pad, N, F_out))
    return out[:B]


# ----------------------------------------------------------------------------
# FC head (fc1 -> relu -> fc2), batch-tiled, bf16 matmul inputs, f32 accumulation.
# ----------------------------------------------------------------------------
def _head_kernel(r_ref, w1_ref, b1_ref, w2_ref, b2_ref, o_ref):
    h = jnp.dot(r_ref[...], w1_ref[...], preferred_element_type=jnp.float32) + b1_ref[...]
    h = jnp.maximum(h, 0.0).astype(r_ref.dtype)          # bf16 for the 2nd MXU pass
    o_ref[...] = (jnp.dot(h, w2_ref[...], preferred_element_type=jnp.float32)
                  + b2_ref[...]).astype(o_ref.dtype)


def dgcnn_head(r_flat, w1, b1, w2, b2, *, compute_dtype=jnp.bfloat16):
    B, D = r_flat.shape
    H = w1.shape[1]
    C = w2.shape[1]

    TB = B if B <= 128 else 128
    num_tiles = pl.cdiv(B, TB)
    B_pad = num_tiles * TB

    r_p = r_flat.astype(compute_dtype)
    if B_pad != B:
        r_p = jnp.pad(r_p, ((0, B_pad - B), (0, 0)))

    out = pl.pallas_call(
        _head_kernel,
        out_shape=jax.ShapeDtypeStruct((B_pad, C), jnp.float32),
        grid_spec=pltpu.PrefetchScalarGridSpec(
            num_scalar_prefetch=0,
            grid=(num_tiles,),
            in_specs=[
                pl.BlockSpec((TB, D), lambda i: (i, 0)),
                pl.BlockSpec((D, H), lambda i: (0, 0)),
                pl.BlockSpec((1, H), lambda i: (0, 0)),
                pl.BlockSpec((H, C), lambda i: (0, 0)),
                pl.BlockSpec((1, C), lambda i: (0, 0)),
            ],
            out_specs=pl.BlockSpec((TB, C), lambda i: (i, 0)),
        ),
        compiler_params=pltpu.CompilerParams(dimension_semantics=("parallel",)),
    )(r_p,
      w1.astype(compute_dtype), b1.reshape(1, H).astype(jnp.float32),
      w2.astype(compute_dtype), b2.reshape(1, C).astype(jnp.float32))
    return out[:B]


# ----------------------------------------------------------------------------
# Tiny JAX glue (not the hot path).
# ----------------------------------------------------------------------------
def normalize_A(A):
    # TODO(synk): normalize_A is referenced but not defined in the provided spec; this
    # follows the reference DGCNN implementation: relu(A), then D^-1/2 A D^-1/2.
    A = jnp.maximum(A, 0.0)
    d = 1.0 / jnp.sqrt(jnp.sum(A, axis=1) + 1e-10)
    return d[:, None] * A * d[None, :]


def batch_norm_1d(x, gamma, beta, eps=1e-5):
    # nn.BatchNorm1d(F_in) applied to x.transpose(1,2): normalizes each feature channel
    # over (batch, nodes).  Training-mode batch statistics (PyTorch module default).
    # TODO(synk): for inference parity with a trained model, use running mean/var instead.
    mean = jnp.mean(x, axis=(0, 1), keepdims=True)
    var = jnp.var(x, axis=(0, 1), keepdims=True)
    return (x - mean) * jax.lax.rsqrt(var + eps) * gamma + beta


def dgcnn_forward(x, params, *, compute_dtype=jnp.bfloat16):
    """Full DGCNN forward. x: (B, N, F_in) f32 -> (B, nclass) f32."""
    B = x.shape[0]
    xn = batch_norm_1d(x.astype(jnp.float32), params["bn_gamma"], params["bn_beta"])
    L = normalize_A(params["A"])
    g = chebynet_forward(xn, L, params["cheb_w"], compute_dtype=compute_dtype)  # (B, N, F_out)
    r = g.reshape(B, -1)
    return dgcnn_head(r, params["fc1_w"], params["fc1_b"], params["fc2_w"], params["fc2_b"],
                      compute_dtype=compute_dtype)


# ----------------------------------------------------------------------------
# Pure-jnp (f32) reference mirroring the PyTorch forward.
# ----------------------------------------------------------------------------
def _dgcnn_reference(x, params):
    B, N, F_in = x.shape
    xn = batch_norm_1d(x.astype(jnp.float32), params["bn_gamma"], params["bn_beta"])
    L = normalize_A(params["A"])
    W = params["cheb_w"]
    K = W.shape[0]
    supports = [jnp.eye(N, dtype=jnp.float32)]
    for i in range(1, K):
        supports.append(L if i == 1 else supports[-1] @ L)
    res = None
    for k in range(K):
        t = jnp.einsum("nm,bmf->bnf", supports[k], xn) @ W[k]
        res = t if res is None else res + t
    res = jax.nn.relu(res)
    r = res.reshape(B, -1)
    h = jax.nn.relu(r @ params["fc1_w"] + params["fc1_b"])
    return h @ params["fc2_w"] + params["fc2_b"]


if __name__ == "__main__":
    # Small shapes consistent with DGCNN on EEG: xdim = (B, N, F_in), K Chebyshev orders.
    B, N, F_in, num_out, K, nclass = 2, 16, 8, 32, 3, 3

    key = jax.random.PRNGKey(0)
    kx, ka, kw, k1, k2 = jax.random.split(key, 5)

    def xavier_normal(k, shape):
        fan_in, fan_out = shape[-2], shape[-1]
        std = (2.0 / (fan_in + fan_out)) ** 0.5
        return std * jax.random.normal(k, shape, dtype=jnp.float32)

    x = jax.random.normal(kx, (B, N, F_in), dtype=jnp.float32)
    params = {
        "A": xavier_normal(ka, (N, N)),                   # learnable adjacency
        "bn_gamma": jnp.ones((F_in,), jnp.float32),
        "bn_beta": jnp.zeros((F_in,), jnp.float32),
        "cheb_w": xavier_normal(kw, (K, F_in, num_out)),  # one GraphConvolution weight per order
        "fc1_w": xavier_normal(k1, (N * num_out, 64)),
        "fc1_b": jnp.zeros((64,), jnp.float32),
        "fc2_w": xavier_normal(k2, (64, nclass)),
        "fc2_b": jnp.zeros((nclass,), jnp.float32),
    }

    out = dgcnn_forward(x, params)
    out = jax.block_until_ready(out)

    ref = _dgcnn_reference(x, params)
    assert out.shape == (B, nclass)
    max_err = float(jnp.max(jnp.abs(out - ref)))
    # bf16 matmul inputs (f32 accumulation) + bf16 activation slab vs a pure-f32 reference:
    # typical max-abs-err at these shapes is ~1e-2; tolerance leaves a wide margin.
    assert jnp.allclose(out, ref, atol=1e-1, rtol=1e-1), f"max_abs_err={max_err}"

    print("KERNEL_OK")
</pallas_src>

<mosaic_0001>
module attributes {stable_mosaic.version = 11 : i64} {
  func.func @_cheby_kernel(%arg0: i32, %arg1: memref<32x16xbf16, #tpu.memory_space<vmem>>, %arg2: memref<48x64xbf16, #tpu.memory_space<vmem>>, %arg3: memref<1x16x16xbf16, #tpu.memory_space<vmem>>, %arg4: memref<1x16x64xbf16, #tpu.memory_space<vmem>>) attributes {dimension_semantics = [#tpu.dimension_semantics<parallel>], iteration_bounds = array<i64: 1>, scalar_prefetch = 0 : i64, scratch_operands = 0 : i64, tpu.core_type = #tpu.core_type<tc>, window_params = [{pipeline_mode = #tpu.pipeline_mode<synchronous>, transform_indices = @transform_0, window_bounds = array<i64: 32, 16>}, {pipeline_mode = #tpu.pipeline_mode<synchronous>, transform_indices = @transform_1, window_bounds = array<i64: 48, 64>}, {transform_indices = @transform_2, window_bounds = array<i64: 1, 16, 16>}, {transform_indices = @transform_3, window_bounds = array<i64: 1, 16, 64>}]} {
    %c0 = arith.constant 0 : index
    %c0_0 = arith.constant 0 : index
    %c0_1 = arith.constant 0 : index
    %0 = vector.load %arg3[%c0, %c0_0, %c0_1] : memref<1x16x16xbf16, #tpu.memory_space<vmem>>, vector<1x16x16xbf16>
    %1 = vector.shape_cast %0 : vector<1x16x16xbf16> to vector<16x16xbf16>
    %c0_2 = arith.constant 0 : index
    %c0_3 = arith.constant 0 : index
    %2 = vector.load %arg1[%c0_2, %c0_3] : memref<32x16xbf16, #tpu.memory_space<vmem>>, vector<32x16xbf16>
    %cst = arith.constant dense<0.000000e+00> : vector<32x16xf32>
    %3 = tpu.matmul %2, %1, %cst {dimension_numbers = #tpu.dot_dimension_numbers<[1], [0], [0], [1], [0, 0, 1, 1], [], []>} : vector<32x16xbf16>, vector<16x16xbf16>, vector<32x16xf32> -> vector<32x16xf32>
    %4 = arith.truncf %3 : vector<32x16xf32> to vector<32x16xbf16>
    %5 = vector.extract_strided_slice %4 {offsets = [0, 0], sizes = [16, 16], strides = [1, 1]} : vector<32x16xbf16> to vector<16x16xbf16>
    %6 = vector.extract_strided_slice %4 {offsets = [16, 0], sizes = [16, 16], strides = [1, 1]} : vector<32x16xbf16> to vector<16x16xbf16>
    %7 = tpu.concatenate %1, %5, %6 in 1 : vector<16x16xbf16>, vector<16x16xbf16>, vector<16x16xbf16> -> vector<16x48xbf16>
    %c0_4 = arith.constant 0 : index
    %c0_5 = arith.constant 0 : index
    %8 = vector.load %arg2[%c0_4, %c0_5] : memref<48x64xbf16, #tpu.memory_space<vmem>>, vector<48x64xbf16>
    %cst_6 = arith.constant dense<0.000000e+00> : vector<16x64xf32>
    %9 = tpu.matmul %7, %8, %cst_6 {dimension_numbers = #tpu.dot_dimension_numbers<[1], [0], [0], [1], [0, 0, 1, 1], [], []>} : vector<16x48xbf16>, vector<48x64xbf16>, vector<16x64xf32> -> vector<16x64xf32>
    %cst_7 = arith.constant 0.000000e+00 : f32
    %10 = vector.broadcast %cst_7 : f32 to vector<16x64xf32>
    %11 = arith.maximumf %9, %10 : vector<16x64xf32>
    %12 = arith.truncf %11 : vector<16x64xf32> to vector<16x64xbf16>
    %c0_8 = arith.constant 0 : index
    %c0_9 = arith.constant 0 : index
    %c0_10 = arith.constant 0 : index
    %13 = vector.load %arg4[%c0_8, %c0_9, %c0_10] : memref<1x16x64xbf16, #tpu.memory_space<vmem>>, vector<1x16x64xbf16>
    %14 = vector.shape_cast %13 : vector<1x16x64xbf16> to vector<16x64xbf16>
    %15 = vector.shape_cast %12 : vector<16x64xbf16> to vector<1x16x64xbf16>
    tpu.vector_store %arg4[%c0_8, %c0_9, %c0_10], %15 {strides = array<i32>} : memref<1x16x64xbf16, #tpu.memory_space<vmem>>, vector<1x16x64xbf16>,
    return
  }
  func.func @transform_0(%arg0: i32) -> (i32, i32) {
    %c0_i32 = arith.constant 0 : i32
    %c0_i32_0 = arith.constant 0 : i32
    %c0_i32_1 = arith.constant 0 : i32
    return %c0_i32, %c0_i32_0 : i32, i32
  }
  func.func @transform_1(%arg0: i32) -> (i32, i32) {
    %c0_i32 = arith.constant 0 : i32
    %c0_i32_0 = arith.constant 0 : i32
    %c0_i32_1 = arith.constant 0 : i32
    return %c0_i32, %c0_i32_0 : i32, i32
  }
  func.func @transform_2(%arg0: i32) -> (i32, i32, i32) {
    %c0_i32 = arith.constant 0 : i32
    %c0_i32_0 = arith.constant 0 : i32
    %c0_i32_1 = arith.constant 0 : i32
    return %arg0, %c0_i32, %c0_i32_0 : i32, i32, i32
  }
  func.func @transform_3(%arg0: i32) -> (i32, i32, i32) {
    %c0_i32 = arith.constant 0 : i32
    %c0_i32_0 = arith.constant 0 : i32
    %c0_i32_1 = arith.constant 0 : i32
    return %arg0, %c0_i32, %c0_i32_0 : i32, i32, i32
  }
}

</mosaic_0001>

<llo_original>
// kernel: tpu_custom_call.1
$region0: #{tpu_custom_call.1}
  #allocation0 [shape = 'u32[]', space=smem, size = 0x4, offset = 0x4, fixed_abs, tag = 'smem constant byte address 0x4 - core index']
  #allocation1 [shape = 'u32[144,128]{1,0:T(1,128)}', space=vmem, size = 0x12000, scoped, tag = 'internal scratch']
  %s0 = inlined_call_operand.vmem [shape: bf16[32,16], index: 0, kind: input, shape index: {}]
  %s1 = inlined_call_operand.vmem [shape: bf16[48,64], index: 1, kind: input, shape index: {}]
  %s2 = inlined_call_operand.hbm [shape: bf16[1,16,16], index: 2, kind: input, shape index: {}]
  %s3 = inlined_call_operand.hbm [shape: bf16[1,16,64], index: 3, kind: output, shape index: {}]
  %s4 = sld [smem:[#allocation0]]
  $region26: #{tpu_custom_call.1} parent=0
    _
  %s6 = ssub.s32 1, %s4
  %s7 = scalar_select 0, %s6, %s4
  $region1: #{tpu_custom_call.1} parent=0
    #allocation2 [shape = 'u8[4096]{0}', space=vmem, size = 0x1000, scoped, tag = 'input window, operand 2, single buffered']
    #allocation3 [shape = 's32[1]{0}', space=sflag, size = 0x4, scoped, tag = 'scoped memory for tpu_custom_call.1']
    #allocation4 [shape = 's32[1]{0}', space=sflag, size = 0x4, scoped, tag = 'scoped memory for tpu_custom_call.1']
    #allocation5 [shape = 'u8[4096]{0}', space=vmem, size = 0x1000, scoped, tag = 'output window, operand 0, single buffered']
    %8 = vsyncpa [#allocation3], 0
    %9 = vsyncpa [#allocation4], 0
    // Predicated region
    $region2: #{tpu_custom_call.1} parent=1 // pred_check
      _
    $region3: #{tpu_custom_call.1} parent=1 // pred_check_branch
      %11 = sbr.rel (0) target = $region5
    $region4: #{tpu_custom_call.1} parent=1 // pred_region
      _
    $region5: #{tpu_custom_call.1} parent=1 // pred_fallthru
      _
    // Predicated region
    $region6: #{tpu_custom_call.1} parent=1 // pred_check
      _
    $region7: #{tpu_custom_call.1} parent=1 // pred_check_branch
      %13 = sbr.rel (0) target = $region9
    $region8: #{tpu_custom_call.1} parent=1 // pred_region
      _
    $region9: #{tpu_custom_call.1} parent=1 // pred_fallthru
      _
    // Predicated region
    $region10: #{tpu_custom_call.1} parent=1 // pred_check
      _
    $region11: #{tpu_custom_call.1} parent=1 // pred_check_branch
      %15 = sbr.rel (0) target = $region13
    $region12: #{tpu_custom_call.1} parent=1 // pred_region
      %s17 = ssub.s32 128, 128
      %18 = vsyncadd [#allocation3], %s17
      %s19 = sshll.u32 [#allocation2], 4
      %s20 = int_to_ptr.vmem [resolvable:$true] %s19
      %25 = dma.hbm_to_vmem [thread:$0]  %s2, 128, %s20, [#allocation3], 64, 64, 4
    $region13: #{tpu_custom_call.1} parent=1 // pred_fallthru
      _
    // Predicated region
    $region14: #{tpu_custom_call.1} parent=1 // pred_check
      _
    $region15: #{tpu_custom_call.1} parent=1 // pred_check_branch
      %27 = sbr.rel (0) target = $region17
    $region16: #{tpu_custom_call.1} parent=1 // pred_region
      %28 = dma.done [#allocation3], 128
    $region17: #{tpu_custom_call.1} parent=1 // pred_fallthru
      _
    %v30 = vld [vmem:[#allocation2] sm:$0xf]
    %v31 = vld [vmem:[#allocation2 + $0x4] sm:$0xf]
    %v32 = vld [vmem:[%s0] sm:$0xf]
    %v33 = vld [vmem:[%s0 + $0x4] sm:$0xf]
    %v34 = vld [vmem:[%s0 + $0x8] sm:$0xf]
    %v35 = vld [vmem:[%s0 + $0xc] sm:$0xf]
    %v40 = vunpack.c.l.b16 %v32
    %v41 = vunpack.c.l.b16 %v33
    %v42 = vunpack.c.l.b16 %v34
    %v43 = vunpack.c.l.b16 %v35
    %v44 = vpack.c.b16 %v41, %v40
    %v45 = vpack.c.b16 %v43, %v42
    %v48 = vunpack.c.l.b16 %v30
    %v49 = vunpack.c.l.b16 %v31
    %v50 = vpack.c.b16 %v49, %v48
    %vm52 = vcmask 130048
    %v54 = vsel %vm52, %v44, 0
    %v57 = vsel %vm52, %v45, 0
    %59 = vmatprep.subr.bf16.mxu0 0
    %60 = vmatpush1.bf16.msra.mxu0 %v50
    %61 = vmatprep.subr.bf16.mxu0 0
    %62 = vmatpush1.bf16.msra.mxu0 0
    %63 = vmatprep.subr.bf16.mxu0 0
    %64 = vmatpush1.bf16.msra.mxu0 0
    %65 = vmatprep.subr.bf16.mxu0 0
    %66 = vmatpush1.bf16.msra.mxu0 0
    %67 = vmatprep.subr.bf16.mxu0 0
    %68 = vmatpush1.bf16.msra.mxu0 0
    %69 = vmatprep.subr.bf16.mxu0 0
    %70 = vmatpush1.bf16.msra.mxu0 0
    %71 = vmatprep.subr.bf16.mxu0 0
    %72 = vmatpush1.bf16.msra.mxu0 0
    %73 = vmatprep.subr.bf16.mxu0 0
    %74 = vmatpush1.bf16.msra.mxu0 0
    %75 = vmatprep.subr.bf16.mxu0 0
    %76 = vmatpush1.bf16.msra.mxu0 0
    %77 = vmatprep.subr.bf16.mxu0 0
    %78 = vmatpush1.bf16.msra.mxu0 0
    %79 = vmatprep.subr.bf16.mxu0 0
    %80 = vmatpush1.bf16.msra.mxu0 0
    %81 = vmatprep.subr.bf16.mxu0 0
    %82 = vmatpush1.bf16.msra.mxu0 0
    %83 = vmatprep.subr.bf16.mxu0 0
    %84 = vmatpush1.bf16.msra.mxu0 0
    %85 = vmatprep.subr.bf16.mxu0 0
    %86 = vmatpush1.bf16.msra.mxu0 0
    %87 = vmatprep.subr.bf16.mxu0 0
    %88 = vmatpush1.bf16.msra.mxu0 0
    %89 = vmatprep.subr.bf16.mxu0 0
    %90 = vmatpush1.bf16.msra.mxu0 0
    %91 = vmatprep.mubr.bf16.mxu0 0
    %92 = vmatmul.mubr.bf16.gmra.mrb[0].mxu0 %v54
    %v93 = vpop.f32.mrb[0].mxu0
    %v94 = vadd.f32 0.0, %v93
    %v95 = vpop.f32.mrb[0].mxu0
    %v96 = vpop.f32.mrb[0].mxu0
    %v97 = vadd.f32 0.0, %v96
    %v98 = vpop.f32.mrb[0].mxu0
    %99 = vmatprep.mubr.bf16.mxu0 0
    %100 = vmatmul.mubr.bf16.gmra.mrb[0].mxu0 %v57
    %v101 = vpop.f32.mrb[0].mxu0
    %v102 = vadd.f32 0.0, %v101
    %v103 = vpop.f32.mrb[0].mxu0
    %v104 = vpop.f32.mrb[0].mxu0
    %v105 = vadd.f32 0.0, %v104
    %v106 = vpop.f32.mrb[0].mxu0
    %107 = vdwg.mxu0
    %v108 = vpack.c.bf16 %v97, %v94
    %v109 = vpack.c.bf16 %v105, %v102
    %111 = vrot.lane.b32.xlu0 %v108, 16
    %v112 = vpop.permute.xlu0 %111
    %114 = vrot.lane.b32.xlu0 %v109, 32
    %v115 = vpop.permute.xlu0 %114
    %v118 = vsel %vm52, %v50, %v112
    %vm119 = vcmask 261120
    %v121 = vsel %vm119, %v118, %v115
    %v122 = vld [vmem:[%s1] sm:$0xf]
    %v123 = vld [vmem:[%s1 + $0x4] sm:$0xf]
    %v124 = vld [vmem:[%s1 + $0x8] sm:$0xf]
    %v125 = vld [vmem:[%s1 + $0xc] sm:$0xf]
    %v126 = vld [vmem:[%s1 + $0x10] sm:$0xf]
    %v127 = vld [vmem:[%s1 + $0x14] sm:$0xf]
    %v134 = vunpack.c.l.b16 %v122
    %v135 = vunpack.c.l.b16 %v123
    %v136 = vunpack.c.l.b16 %v124
    %v137 = vunpack.c.l.b16 %v125
    %v138 = vunpack.c.l.b16 %v126
    %v139 = vunpack.c.l.b16 %v127
    %v140 = vpack.c.b16 %v135, %v134
    %v141 = vpack.c.b16 %v137, %v136
    %v142 = vpack.c.b16 %v139, %v138
    %vm146 = vcmask 392192
    %v147 = vsel %vm146, %v121, 0
    %149 = vmatprep.subr.bf16.mxu0 0
    %150 = vmatpush1.bf16.msra.mxu0 %v140
    %151 = vmatprep.subr.bf16.mxu0 0
    %152 = vmatpush1.bf16.msra.mxu0 %v141
    %153 = vmatprep.subr.bf16.mxu0 0
    %154 = vmatpush1.bf16.msra.mxu0 %v142
    %155 = vmatprep.subr.bf16.mxu0 0
    %156 = vmatpush1.bf16.msra.mxu0 0
    %157 = vmatprep.subr.bf16.mxu0 0
    %158 = vmatpush1.bf16.msra.mxu0 0
    %159 = vmatprep.subr.bf16.mxu0 0
    %160 = vmatpush1.bf16.msra.mxu0 0
    %161 = vmatprep.subr.bf16.mxu0 0
    %162 = vmatpush1.bf16.msra.mxu0 0
    %163 = vmatprep.subr.bf16.mxu0 0
    %164 = vmatpush1.bf16.msra.mxu0 0
    %165 = vmatprep.subr.bf16.mxu0 0
    %166 = vmatpush1.bf16.msra.mxu0 0
    %167 = vmatprep.subr.bf16.mxu0 0
    %168 = vmatpush1.bf16.msra.mxu0 0
    %169 = vmatprep.subr.bf16.mxu0 0
    %170 = vmatpush1.bf16.msra.mxu0 0
    %171 = vmatprep.subr.bf16.mxu0 0
    %172 = vmatpush1.bf16.msra.mxu0 0
    %173 = vmatprep.subr.bf16.mxu0 0
    %174 = vmatpush1.bf16.msra.mxu0 0
    %175 = vmatprep.subr.bf16.mxu0 0
    %176 = vmatpush1.bf16.msra.mxu0 0
    %177 = vmatprep.subr.bf16.mxu0 0
    %178 = vmatpush1.bf16.msra.mxu0 0
    %179 = vmatprep.subr.bf16.mxu0 0
    %180 = vmatpush1.bf16.msra.mxu0 0
    %181 = vmatprep.mubr.bf16.mxu0 0
    %182 = vmatmul.mubr.bf16.gmra.mrb[0].mxu0 %v147
    %v183 = vpop.f32.mrb[0].mxu0
    %v184 = vadd.f32 0.0, %v183
    %v185 = vpop.f32.mrb[0].mxu0
    %v186 = vpop.f32.mrb[0].mxu0
    %v187 = vadd.f32 0.0, %v186
    %v188 = vpop.f32.mrb[0].mxu0
    %189 = vdwg.mxu0
    %v190 = vmax.f32 %v184, 0.0
    %v191 = vmax.f32 %v187, 0.0
    %v192 = vpack.c.bf16 %v191, %v190
    %v194 = vunpack.c.l.b16 %v192
    %v195 = vunpack.c.h.b16 %v192
    %v196 = vpack.c.b16 %v194, %v194
    %v197 = vpack.c.b16 %v195, %v195
    %vm200 = vcmask 519168
    %201 = vst.msk [vmem:[#allocation5] sm:$0xf] %vm200, %v196
    %202 = vst.msk [vmem:[#allocation5 + $0x4] sm:$0xf] %vm200, %v197
    // Predicated region
    $region18: #{tpu_custom_call.1} parent=1 // pred_check
      _
    $region19: #{tpu_custom_call.1} parent=1 // pred_check_branch
      %204 = sbr.rel (0) target = $region21
    $region20: #{tpu_custom_call.1} parent=1 // pred_region
      %s206 = ssub.s32 128, 128
      %207 = vsyncadd [#allocation4], %s206
      %s208 = sshll.u32 [#allocation5], 4
      %s209 = int_to_ptr.vmem [resolvable:$true] %s208
      %214 = dma.vmem_to_hbm [thread:$0]  %s209, 128, %s3, [#allocation4], 64, 64, 4
    $region21: #{tpu_custom_call.1} parent=1 // pred_fallthru
      _
    // Predicated region
    $region22: #{tpu_custom_call.1} parent=1 // pred_check
      _
    $region23: #{tpu_custom_call.1} parent=1 // pred_check_branch
      %216 = sbr.rel (0) target = $region25
    $region24: #{tpu_custom_call.1} parent=1 // pred_region
      %217 = dma.done [#allocation4], 128
    $region25: #{tpu_custom_call.1} parent=1 // pred_fallthru
      _
    %218 = vsyncpa [#allocation3], 1
    %219 = vsyncpa [#allocation4], 1

</llo_original>
